<compile_context>
chip_gen: v6e
topology: v6e:2x2x1
jax: 0.10.0
libtpu: 0.0.40
codegen_flags: <defaults>
</compile_context>

<pallas_src>
import jax
import jax.numpy as jnp
from jax import lax
from jax.experimental import pallas as pl
from jax.experimental.pallas import tpu as pltpu


def _round_up(x, m):
    return ((x + m - 1) // m) * m


def _vmem_cap_bytes():
    """~75% of per-core VMEM; 48 MiB fallback (safe on v7x's 64 MiB cores)."""
    try:
        return int(pltpu.get_tpu_info().vmem_capacity_bytes) * 3 // 4
    except Exception:
        return 48 * 1024 * 1024


def _make_linear_kernel(*, has_bias, multi_k, cast_to, needs_k_mask, tk, k_total):
    """Build the matmul(+bias) kernel for a (M,K)x(K,N) contraction."""

    def compute_tile(x_ref, w_ref):
        x = x_ref[...]
        if needs_k_mask:
            # Last K tile is ragged: zero the stale columns read past K.
            k = pl.program_id(2)
            col = lax.broadcasted_iota(jnp.int32, x.shape, 1)
            x = jnp.where(col + k * tk < k_total, x, jnp.zeros_like(x))
        if cast_to is not None:
            # In-kernel cast of the activation tile (e.g. f32 -> bf16 MXU input).
            x = x.astype(cast_to)
        # Canonical (tm,tk) x (tk,tn) -> (tm,tn); f32 accumulation on the MXU.
        return jnp.dot(x, w_ref[...], preferred_element_type=jnp.float32)

    if not multi_k:
        # Single K step: no accumulator scratch, no init/finalize copies.
        if has_bias:
            def kernel(x_ref, w_ref, b_ref, o_ref):
                acc = compute_tile(x_ref, w_ref) + b_ref[...]
                o_ref[...] = acc.astype(o_ref.dtype)
        else:
            def kernel(x_ref, w_ref, o_ref):
                o_ref[...] = compute_tile(x_ref, w_ref).astype(o_ref.dtype)
        return kernel

    def body(x_ref, w_ref, b_ref, o_ref, acc_ref):
        k = pl.program_id(2)
        part = compute_tile(x_ref, w_ref)

        @pl.when(k == 0)
        def _init():
            acc_ref[...] = part            # direct write, no zeros + +=

        @pl.when(k != 0)
        def _accum():
            acc_ref[...] = acc_ref[...] + part

        @pl.when(k == pl.num_programs(2) - 1)
        def _finalize():
            out = acc_ref[...]
            if has_bias:
                out = out + b_ref[...]
            o_ref[...] = out.astype(o_ref.dtype)

    if has_bias:
        def kernel(x_ref, w_ref, b_ref, o_ref, acc_ref):
            body(x_ref, w_ref, b_ref, o_ref, acc_ref)
    else:
        def kernel(x_ref, w_ref, o_ref, acc_ref):
            body(x_ref, w_ref, None, o_ref, acc_ref)
    return kernel


def prepare_linear_params(weight, bias=None, *, compute_dtype=None, tk_max=1024):
    """One-time parameter prep (do this at init, NOT per forward).

    weight: (out_dim, in_dim) as in torch.nn.Linear.
    Transposes to (K, N), optionally casts (compute_dtype=jnp.bfloat16 is the
    recommended fast MXU path), and zero-pads K/N once so the kernel never
    pads or slices per call.
    """
    weight = jnp.asarray(weight)
    out_dim, in_dim = weight.shape

    w_kn = weight.T                                   # (K, N), once
    if compute_dtype is not None and w_kn.dtype != compute_dtype:
        w_kn = w_kn.astype(compute_dtype)

    # --- N tiling plan: multiples of 256 for the v6e/v7x 256-wide MXU. ---
    if out_dim < 128:
        tn, n_pad = out_dim, out_dim                  # full-N block, no pad
    else:
        tn = 512 if (out_dim % 512 == 0 or out_dim >= 1024) else 256
        n_pad = _round_up(out_dim, tn)

    # --- K tiling plan: split only when K is large. ---
    K = in_dim
    if K <= tk_max:
        tk, k_pad = K, K                              # full-K block
    else:
        tk = 512
        k_pad = _round_up(K, tk)

    if (n_pad != out_dim) or (k_pad != K):
        w_kn = jnp.pad(w_kn, ((0, k_pad - K), (0, n_pad - out_dim)))

    b_row = None
    if bias is not None:
        b_row = jnp.asarray(bias, jnp.float32).reshape(1, out_dim)
        if n_pad != out_dim:
            b_row = jnp.pad(b_row, ((0, 0), (0, n_pad - out_dim)))

    return dict(w_kn=w_kn, b_row=b_row, in_dim=in_dim, out_dim=out_dim,
                tk=tk, tn=tn, k_pad=k_pad, n_pad=n_pad)


def linear_apply(params, x, *, tm=512, force_pallas=False):
    """y = x @ W.T + b using the prepared params (matches torch.nn.Linear)."""
    in_dim, out_dim = params["in_dim"], params["out_dim"]
    w, b = params["w_kn"], params["b_row"]
    tk, tn = params["tk"], params["tn"]
    k_pad, n_pad = params["k_pad"], params["n_pad"]
    K = in_dim

    orig_dtype = x.dtype
    lead_shape = x.shape[:-1]
    x2d = x.reshape(-1, in_dim)
    M = x2d.shape[0]
    has_bias = b is not None

    # --- Small-problem bypass: fixed pallas_call overhead dominates here. ---
    if not force_pallas and (M * K * out_dim) < (1 << 18):
        w_use = w[:K, :out_dim] if (k_pad != K or n_pad != out_dim) else w
        y = jnp.dot(x2d, w_use, preferred_element_type=jnp.float32)
        if has_bias:
            y = y + b[:, :out_dim]
        return y.astype(orig_dtype).reshape(*lead_shape, out_dim)

    # --- Tile / grid plan. ---
    tm_ = M if M <= tm else _round_up(tm, 8)
    k_blocks = k_pad // tk
    j_blocks = n_pad // tn
    i_blocks = -(-M // tm_)
    if i_blocks == 1 and j_blocks == 1 and M > 8:
        # Give both v7x TensorCores a parallel block (cheap elsewhere).
        tm_ = max(8, _round_up((M + 1) // 2, 8))
        i_blocks = -(-M // tm_)

    multi_k = k_blocks > 1
    needs_k_mask = multi_k and (K % tk != 0)
    cast_to = w.dtype if x2d.dtype != w.dtype else None

    kernel = _make_linear_kernel(has_bias=has_bias, multi_k=multi_k,
                                 cast_to=cast_to, needs_k_mask=needs_k_mask,
                                 tk=tk, k_total=K)

    if multi_k:
        grid = (i_blocks, j_blocks, k_blocks)
        x_spec = pl.BlockSpec((tm_, tk), lambda i, j, k: (i, k))
        w_spec = pl.BlockSpec((tk, tn), lambda i, j, k: (k, j))
        b_spec = pl.BlockSpec((1, tn), lambda i, j, k: (0, j))
        o_spec = pl.BlockSpec((tm_, tn), lambda i, j, k: (i, j))
        scratch = [pltpu.VMEM((tm_, tn), jnp.float32)]
        semantics = ("parallel", "parallel", "arbitrary")
    else:
        grid = (i_blocks, j_blocks)
        x_spec = pl.BlockSpec((tm_, tk), lambda i, j: (i, 0))
        w_spec = pl.BlockSpec((tk, tn), lambda i, j: (0, j))
        b_spec = pl.BlockSpec((1, tn), lambda i, j: (0, j))
        o_spec = pl.BlockSpec((tm_, tn), lambda i, j: (i, j))
        scratch = []
        semantics = ("parallel", "parallel")

    in_specs = [x_spec, w_spec]
    args = [x2d, w]
    if has_bias:
        in_specs.append(b_spec)
        args.append(b)

    # --- VMEM budget from the tile footprint, capped below per-core VMEM. ---
    x_item = jnp.dtype(x2d.dtype).itemsize
    w_item = jnp.dtype(w.dtype).itemsize
    o_item = jnp.dtype(orig_dtype).itemsize
    tile_bytes = 2 * (tm_ * tk * x_item + tk * tn * w_item)   # double-buffered inputs
    tile_bytes += 2 * (tm_ * tn * o_item)                     # double-buffered output
    if multi_k:
        tile_bytes += tm_ * tn * 4                            # f32 accumulator
    if has_bias:
        tile_bytes += 2 * tn * 4
    vmem_limit = int(min(max(2 * tile_bytes, 16 * 1024 * 1024), _vmem_cap_bytes()))

    cost = pl.CostEstimate(
        flops=2 * M * out_dim * K,
        transcendentals=0,
        bytes_accessed=(M * K * x_item + k_pad * n_pad * w_item
                        + M * out_dim * o_item
                        + (n_pad * 4 if has_bias else 0)),
    )

    out2d = pl.pallas_call(
        kernel,
        out_shape=jax.ShapeDtypeStruct((M, out_dim), orig_dtype),
        grid_spec=pltpu.PrefetchScalarGridSpec(
            num_scalar_prefetch=0,
            grid=grid,
            in_specs=in_specs,
            out_specs=o_spec,
            scratch_shapes=scratch,
        ),
        compiler_params=pltpu.CompilerParams(
            dimension_semantics=semantics,
            vmem_limit_bytes=vmem_limit,
        ),
        cost_estimate=cost,
    )(*args)

    return out2d.reshape(*lead_shape, out_dim)


class PallasLinear:
    """Mirrors the PyTorch module's forward: y = x @ W.T + b."""

    def __init__(self, weight, bias=None, *, compute_dtype=None, tk_max=1024):
        # compute_dtype=jnp.bfloat16 is the recommended fast MXU path
        # (weight cast once here; x tile cast in-kernel; f32 accumulation).
        self.params = prepare_linear_params(weight, bias,
                                            compute_dtype=compute_dtype,
                                            tk_max=tk_max)

    def __call__(self, x, *, tm=512, force_pallas=False):
        return linear_apply(self.params, x, tm=tm, force_pallas=force_pallas)


if __name__ == "__main__":
    key = jax.random.PRNGKey(0)
    kx, kw, kb, kx2, kw2, kb2, kx3, kw3, kb3 = jax.random.split(key, 9)

    # --- Module config: Linear(in_dimension=32, out_dimension=64, bias=True) ---
    in_dim, out_dim = 32, 64
    batch, seq = 2, 8
    # TODO(synk): initializer.default_weight_init is project-specific; using a
    # deterministic scaled-normal init as a stand-in.
    weight = jax.random.normal(kw, (out_dim, in_dim), dtype=jnp.float32) * 0.02
    bias = jax.random.normal(kb, (out_dim,), dtype=jnp.float32) * 0.02
    x = jax.random.normal(kx, (batch, seq, in_dim), dtype=jnp.float32)
    y_ref = x @ weight.T + bias

    lin = PallasLinear(weight, bias)                       # exact f32 path
    y = jax.block_until_ready(lin(x))                      # small-problem bypass
    assert y.shape == (batch, seq, out_dim)
    assert jnp.allclose(y, y_ref, atol=1e-5, rtol=1e-5)

    y_k = jax.block_until_ready(lin(x, force_pallas=True))  # Pallas kernel
    assert jnp.allclose(y_k, y_ref, atol=1e-5, rtol=1e-5)

    # bias-free kernel variant
    lin_nb = PallasLinear(weight, None)
    y_nb = jax.block_until_ready(lin_nb(x, force_pallas=True))
    assert jnp.allclose(y_nb, x @ weight.T, atol=1e-5, rtol=1e-5)

    # bf16 MXU inputs (weight cast once at prep; x tile cast in-kernel), f32 accum
    lin_bf16 = PallasLinear(weight, bias, compute_dtype=jnp.bfloat16)
    y_bf = jax.block_until_ready(lin_bf16(x, force_pallas=True))
    assert jnp.allclose(y_bf, y_ref, atol=2e-2, rtol=2e-2)

    # Multi-K accumulator path + ragged-N masked writeback:
    # in=1536 (tk=512, 3 K tiles), out=320 (tn=256, ragged last N block), M=160.
    in2, out2, m2 = 1536, 320, 160
    w2 = jax.random.normal(kw2, (out2, in2), dtype=jnp.float32) * 0.02
    b2 = jax.random.normal(kb2, (out2,), dtype=jnp.float32) * 0.02
    x2 = jax.random.normal(kx2, (m2, in2), dtype=jnp.float32)
    y2 = jax.block_until_ready(PallasLinear(w2, b2)(x2, force_pallas=True))
    assert jnp.allclose(y2, x2 @ w2.T + b2, atol=1e-4, rtol=1e-4)

    # Ragged-K in-kernel masking + forced 2 parallel M blocks:
    # in=1100 (K % 512 != 0), out=192, M=48.
    in3, out3, m3 = 1100, 192, 48
    w3 = jax.random.normal(kw3, (out3, in3), dtype=jnp.float32) * 0.02
    b3 = jax.random.normal(kb3, (out3,), dtype=jnp.float32) * 0.02
    x3 = jax.random.normal(kx3, (m3, in3), dtype=jnp.float32)
    y3 = jax.block_until_ready(PallasLinear(w3, b3)(x3, force_pallas=True))
    assert jnp.allclose(y3, x3 @ w3.T + b3, atol=1e-4, rtol=1e-4)

    print("KERNEL_OK")
</pallas_src>

<mosaic_0001>
module attributes {stable_mosaic.version = 11 : i64} {
  func.func @kernel(%arg0: i32, %arg1: i32, %arg2: memref<8x32xf32, #tpu.memory_space<vmem>>, %arg3: memref<32x64xf32, #tpu.memory_space<vmem>>, %arg4: memref<1x64xf32, #tpu.memory_space<vmem>>, %arg5: memref<8x64xf32, #tpu.memory_space<vmem>>) attributes {dimension_semantics = [#tpu.dimension_semantics<parallel>, #tpu.dimension_semantics<parallel>], iteration_bounds = array<i64: 2, 1>, scalar_prefetch = 0 : i64, scratch_operands = 0 : i64, tpu.core_type = #tpu.core_type<tc>, window_params = [{transform_indices = @transform_0, window_bounds = array<i64: 8, 32>}, {transform_indices = @transform_1, window_bounds = array<i64: 32, 64>}, {transform_indices = @transform_2, window_bounds = array<i64: 1, 64>}, {transform_indices = @transform_3, window_bounds = array<i64: 8, 64>}]} {
    %c0 = arith.constant 0 : index
    %c0_0 = arith.constant 0 : index
    %0 = vector.load %arg2[%c0, %c0_0] : memref<8x32xf32, #tpu.memory_space<vmem>>, vector<8x32xf32>
    %c0_1 = arith.constant 0 : index
    %c0_2 = arith.constant 0 : index
    %1 = vector.load %arg3[%c0_1, %c0_2] : memref<32x64xf32, #tpu.memory_space<vmem>>, vector<32x64xf32>
    %cst = arith.constant dense<0.000000e+00> : vector<8x64xf32>
    %2 = tpu.matmul %0, %1, %cst {dimension_numbers = #tpu.dot_dimension_numbers<[1], [0], [0], [1], [0, 0, 1, 1], [], []>} : vector<8x32xf32>, vector<32x64xf32>, vector<8x64xf32> -> vector<8x64xf32>
    %c0_3 = arith.constant 0 : index
    %c0_4 = arith.constant 0 : index
    %3 = vector.load %arg4[%c0_3, %c0_4] : memref<1x64xf32, #tpu.memory_space<vmem>>, vector<1x64xf32>
    %4 = vector.broadcast %3 : vector<1x64xf32> to vector<8x64xf32>
    %5 = arith.addf %2, %4 : vector<8x64xf32>
    %c0_5 = arith.constant 0 : index
    %c0_6 = arith.constant 0 : index
    %6 = vector.load %arg5[%c0_5, %c0_6] : memref<8x64xf32, #tpu.memory_space<vmem>>, vector<8x64xf32>
    tpu.vector_store %arg5[%c0_5, %c0_6], %5 {strides = array<i32>} : memref<8x64xf32, #tpu.memory_space<vmem>>, vector<8x64xf32>,
    return
  }
  func.func @transform_0(%arg0: i32, %arg1: i32) -> (i32, i32) {
    %c0_i32 = arith.constant 0 : i32
    %c0_i32_0 = arith.constant 0 : i32
    return %arg0, %c0_i32 : i32, i32
  }
  func.func @transform_1(%arg0: i32, %arg1: i32) -> (i32, i32) {
    %c0_i32 = arith.constant 0 : i32
    %c0_i32_0 = arith.constant 0 : i32
    return %c0_i32, %arg1 : i32, i32
  }
  func.func @transform_2(%arg0: i32, %arg1: i32) -> (i32, i32) {
    %c0_i32 = arith.constant 0 : i32
    %c0_i32_0 = arith.constant 0 : i32
    return %c0_i32, %arg1 : i32, i32
  }
  func.func @transform_3(%arg0: i32, %arg1: i32) -> (i32, i32) {
    %c0_i32 = arith.constant 0 : i32
    return %arg0, %arg1 : i32, i32
  }
}

</mosaic_0001>

<llo_original>
// kernel: tpu_custom_call.1
$region0: #{tpu_custom_call.1}
  #allocation0 [shape = 'u32[]', space=smem, size = 0x4, offset = 0x4, fixed_abs, tag = 'smem constant byte address 0x4 - core index']
  #allocation1 [shape = 'u32[144,128]{1,0:T(1,128)}', space=vmem, size = 0x12000, scoped, tag = 'internal scratch']
  %s0 = inlined_call_operand.hbm [shape: f32[16,32], index: 0, kind: input, shape index: {}]
  %s1 = inlined_call_operand.hbm [shape: f32[32,64], index: 1, kind: input, shape index: {}]
  %s2 = inlined_call_operand.vmem [shape: f32[1,64], index: 2, kind: input, shape index: {}]
  %s3 = inlined_call_operand.hbm [shape: f32[16,64], index: 3, kind: output, shape index: {}]
  %s4 = sld [smem:[#allocation0]]
  $region53: #{tpu_custom_call.1} parent=0
    _
  %s6 = ssub.s32 1, %s4
  %s7 = scalar_select 0, %s6, %s4
  $region1: #{tpu_custom_call.1} parent=0
    #allocation2 [shape = 'u8[8192]{0}', space=vmem, size = 0x2000, scoped, tag = 'input window, operand 0']
    #allocation3 [shape = 's32[2]{0}', space=sflag, size = 0x8, scoped, tag = 'scoped memory for tpu_custom_call.1']
    #allocation4 [shape = 's32[2]{0}', space=sflag, size = 0x8, scoped, tag = 'scoped memory for tpu_custom_call.1']
    #allocation5 [shape = 'u8[16384]{0}', space=vmem, size = 0x4000, scoped, tag = 'input window, operand 1, single buffered']
    #allocation6 [shape = 's32[1]{0}', space=sflag, size = 0x4, scoped, tag = 'scoped memory for tpu_custom_call.1']
    #allocation7 [shape = 'u8[8192]{0}', space=vmem, size = 0x2000, scoped, tag = 'output window, operand 0']
    %8 = vsyncpa [#allocation3], 0
    %s9 = scalar_lea.sflag [#allocation3], 1
    %10 = vsyncpa %s9, 0
    %11 = vsyncpa [#allocation6], 0
    %12 = vsyncpa [#allocation4], 0
    %s13 = scalar_lea.sflag [#allocation4], 1
    %14 = vsyncpa %s13, 0
    loop: start=0, step=1, limit=4
    $region2: #{tpu_custom_call.1} parent=1 // loop_pre_header
      _
    $region3: #{tpu_custom_call.1} parent=1 // loop_header
      %s16 = sphi 0, %s20
      %p17 = scmp.ge.s32.totalorder %s16, 4
      %s23 = sphi 0, %s35
      %s24 = sphi 0, %s31
      %s25 = sphi 0, %s23
      %s26 = sphi 0, %s24
      %s27 = sphi 0, %s25
      %s28 = sphi 0, %s26
      %s38 = sphi 0, %s40
      %s41 = sphi 0, %s38
      %s42 = sphi 0, %s41
      %s58 = sphi 0, %s42
      %s64 = sphi 0, %s66
      %s67 = sphi 0, %s64
      %s68 = sphi 0, %s67
      %s84 = sphi 0, %s68
      %s90 = sphi 0, %s92
      %s93 = sphi 0, %s90
      %s94 = sphi 0, %s93
      %s110 = sphi 0, %s94
      %s118 = sphi 0, %s120
      %s121 = sphi 0, %s118
      %s122 = sphi 0, %s121
      %s138 = sphi 0, %s122
    $region4: #{tpu_custom_call.1} parent=1 // loop_header_branch
      %19 = sbr.rel (%p17) target = $region8
    $region5: #{tpu_custom_call.1} parent=1 // loop_body
      %s21 = ssub.s32 %s16, 1
      %s22 = ssub.s32 %s16, 2
      %s29 = sadd.s32 1, %s24
      %p30 = scmp.ge.s32.totalorder %s29, 1
      %s31 = scalar_select %p30, 0, %s29
      %s32 = sadd.s32 1, %s23
      %s33 = scalar_select %p30, %s32, %s23
      %p34 = scmp.ge.s32.totalorder %s33, 2
      %s35 = scalar_select %p34, 0, %s33
      %s36 = ssub.s32 %s23, %s35
      %p37 = scmp.eq.s32.totalorder %s36, 0
      %s39 = sadd.s32 %s38, 1
      %s40 = scalar_select %p37, %s38, %s39
      %p43 = pneg %p37
      %p44 = scmp.eq.s32.totalorder %s16, 1
      %p45 = por %p43, %p44
      %p46 = scmp.ne.s32.totalorder %s38, %s41
      %p47 = scmp.eq.s32.totalorder %s16, 0
      %p48 = por %p46, %p47
      %p49 = scmp.ne.s32.totalorder %s38, %s41
      %p50 = scmp.eq.s32.totalorder %s21, 1
      %p51 = por %p49, %p50
      %p52 = scmp.ne.s32.totalorder %s41, %s42
      %p53 = scmp.eq.s32.totalorder %s21, 0
      %p54 = por %p52, %p53
      %p55 = scmp.ne.s32.totalorder %s41, %s42
      %p56 = scmp.eq.s32.totalorder %s22, 1
      %p57 = por %p55, %p56
      %p59 = scmp.ne.s32.totalorder %s42, %s58
      %p60 = scmp.eq.s32.totalorder %s22, 0
      %p61 = por %p59, %p60
      %s62 = ssub.s32 %s24, %s31
      %p63 = scmp.eq.s32.totalorder %s62, 0
      %s65 = sadd.s32 %s64, 1
      %s66 = scalar_select %p63, %s64, %s65
      %p69 = pneg %p63
      %p70 = scmp.eq.s32.totalorder %s16, 1
      %p71 = por %p69, %p70
      %p72 = scmp.ne.s32.totalorder %s64, %s67
      %p73 = scmp.eq.s32.totalorder %s16, 0
      %p74 = por %p72, %p73
      %p75 = scmp.ne.s32.totalorder %s64, %s67
      %p76 = scmp.eq.s32.totalorder %s21, 1
      %p77 = por %p75, %p76
      %p78 = scmp.ne.s32.totalorder %s67, %s68
      %p79 = scmp.eq.s32.totalorder %s21, 0
      %p80 = por %p78, %p79
      %p81 = scmp.ne.s32.totalorder %s67, %s68
      %p82 = scmp.eq.s32.totalorder %s22, 1
      %p83 = por %p81, %p82
      %p85 = scmp.ne.s32.totalorder %s68, %s84
      %p86 = scmp.eq.s32.totalorder %s22, 0
      %p87 = por %p85, %p86
      %s88 = ssub.s32 %s24, %s31
      %p89 = scmp.eq.s32.totalorder %s88, 0
      %s91 = sadd.s32 %s90, 1
      %s92 = scalar_select %p89, %s90, %s91
      %p95 = pneg %p89
      %p96 = scmp.eq.s32.totalorder %s16, 1
      %p97 = por %p95, %p96
      %p98 = scmp.ne.s32.totalorder %s90, %s93
      %p99 = scmp.eq.s32.totalorder %s16, 0
      %p100 = por %p98, %p99
      %p101 = scmp.ne.s32.totalorder %s90, %s93
      %p102 = scmp.eq.s32.totalorder %s21, 1
      %p103 = por %p101, %p102
      %p104 = scmp.ne.s32.totalorder %s93, %s94
      %p105 = scmp.eq.s32.totalorder %s21, 0
      %p106 = por %p104, %p105
      %p107 = scmp.ne.s32.totalorder %s93, %s94
      %p108 = scmp.eq.s32.totalorder %s22, 1
      %p109 = por %p107, %p108
      %p111 = scmp.ne.s32.totalorder %s94, %s110
      %p112 = scmp.eq.s32.totalorder %s22, 0
      %p113 = por %p111, %p112
      %s114 = ssub.s32 %s23, %s35
      %s115 = ssub.s32 %s24, %s31
      %s116 = sor.u32 %s114, %s115
      %p117 = scmp.eq.s32.totalorder %s116, 0
      %s119 = sadd.s32 %s118, 1
      %s120 = scalar_select %p117, %s118, %s119
      %p123 = pneg %p117
      %p124 = scmp.eq.s32.totalorder %s16, 1
      %p125 = por %p123, %p124
      %p126 = scmp.ne.s32.totalorder %s118, %s121
      %p127 = scmp.eq.s32.totalorder %s16, 0
      %p128 = por %p126, %p127
      %p129 = scmp.ne.s32.totalorder %s118, %s121
      %p130 = scmp.eq.s32.totalorder %s21, 1
      %p131 = por %p129, %p130
      %p132 = scmp.ne.s32.totalorder %s121, %s122
      %p133 = scmp.eq.s32.totalorder %s21, 0
      %p134 = por %p132, %p133
      %p135 = scmp.ne.s32.totalorder %s121, %s122
      %p136 = scmp.eq.s32.totalorder %s22, 1
      %p137 = por %p135, %p136
      %p139 = scmp.ne.s32.totalorder %s122, %s138
      %p140 = scmp.eq.s32.totalorder %s22, 0
      %p141 = por %p139, %p140
      %p142 = scmp.le.s32.totalorder 1, %s16
      %p143 = scmp.lt.s32.totalorder %s16, 3
      %p144 = pnand %p142, %p143
      %p145 = pneg %p144
      // Predicated region
      $region9: #{tpu_custom_call.1} parent=5 // pred_check
        _
      $region10: #{tpu_custom_call.1} parent=5 // pred_check_branch
        %147 = sbr.rel (%p144) target = $region12
      $region11: #{tpu_custom_call.1} parent=5 // pred_region
        %s148 = ssub.s32 %s16, 1
        // Predicated region
        $region13: #{tpu_custom_call.1} parent=11 // pred_check
          %p149 = pneg %p80
        $region14: #{tpu_custom_call.1} parent=11 // pred_check_branch
          %151 = sbr.rel (%p149) target = $region16
        $region15: #{tpu_custom_call.1} parent=11 // pred_region
          %s153 = ssub.s32 512, 512
          %154 = vsyncadd [#allocation6], %s153
          %s155 = smul.addr %s26, 128
          %s156 = scalar_lea.hbm %s1, %s155
          %s157 = sshll.u32 [#allocation5], 4
          %s158 = int_to_ptr.vmem [resolvable:$true] %s157
          %163 = dma.hbm_to_vmem [thread:$0]  %s156, 512, %s158, [#allocation6], 128, 128, 8
        $region16: #{tpu_custom_call.1} parent=11 // pred_fallthru
          _
        // Predicated region
        $region17: #{tpu_custom_call.1} parent=11 // pred_check
          %p164 = pneg %p106
        $region18: #{tpu_custom_call.1} parent=11 // pred_check_branch
          %166 = sbr.rel (%p164) target = $region20
        $region19: #{tpu_custom_call.1} parent=11 // pred_region
          %p167 = scmp.lt.s32.totalorder %s26, 0
          %s168 = scalar_select %p167, %s26, 0
          %s169 = scalar_lea.vmem %s2, %s168
        $region20: #{tpu_custom_call.1} parent=11 // pred_fallthru
          _
      $region12: #{tpu_custom_call.1} parent=5 // pred_fallthru
        _
      %p170 = scmp.lt.s32.totalorder %s16, 2
      // Predicated region
      $region21: #{tpu_custom_call.1} parent=5 // pred_check
        %p171 = pneg %p170
      $region22: #{tpu_custom_call.1} parent=5 // pred_check_branch
        %173 = sbr.rel (%p171) target = $region24
      $region23: #{tpu_custom_call.1} parent=5 // pred_region
        // Predicated region
        $region25: #{tpu_custom_call.1} parent=23 // pred_check
          %p174 = pneg %p48
        $region26: #{tpu_custom_call.1} parent=23 // pred_check_branch
          %176 = sbr.rel (%p174) target = $region28
        $region27: #{tpu_custom_call.1} parent=23 // pred_region
          %s177 = sand.u32 %s38, 1
          %s178 = scalar_lea.sflag [#allocation3], %s177
          %s179 = sand.u32 %s38, 1
          %s180 = smul.addr %s179, 8
          %s181 = scalar_lea.vmem [#allocation2], %s180
          %s183 = ssub.s32 128, 128
          %184 = vsyncadd %s178, %s183
          %s185 = smul.addr %s23, 128
          %s186 = scalar_lea.hbm %s0, %s185
          %s188 = sshll.u32 %s181, 4
          %s189 = int_to_ptr.vmem [resolvable:$true] %s188
          %191 = dma.hbm_to_vmem [thread:$0]  %s186, 128, %s189, %s178
        $region28: #{tpu_custom_call.1} parent=23 // pred_fallthru
          _
      $region24: #{tpu_custom_call.1} parent=5 // pred_fallthru
        _
      %p192 = scmp.le.s32.totalorder 1, %s16
      %p193 = scmp.lt.s32.totalorder %s16, 3
      %p194 = pnand %p192, %p193
      %p195 = pneg %p194
      // Predicated region
      $region29: #{tpu_custom_call.1} parent=5 // pred_check
        _
      $region30: #{tpu_custom_call.1} parent=5 // pred_check_branch
        %197 = sbr.rel (%p194) target = $region32
      $region31: #{tpu_custom_call.1} parent=5 // pred_region
        %s198 = ssub.s32 %s16, 1
        %s199 = sand.u32 %s41, 1
        %s200 = scalar_lea.sflag [#allocation3], %s199
        %s201 = sand.u32 %s41, 1
        %s202 = smul.addr %s201, 8
        %s203 = scalar_lea.vmem [#allocation2], %s202
        // Predicated region
        $region33: #{tpu_custom_call.1} parent=31 // pred_check
          %p204 = pneg %p54
        $region34: #{tpu_custom_call.1} parent=31 // pred_check_branch
          %206 = sbr.rel (%p204) target = $region36
        $region35: #{tpu_custom_call.1} parent=31 // pred_region
          %207 = dma.done %s200, 128
        $region36: #{tpu_custom_call.1} parent=31 // pred_fallthru
          _
        // Predicated region
        $region37: #{tpu_custom_call.1} parent=31 // pred_check
          %p208 = pneg %p80
        $region38: #{tpu_custom_call.1} parent=31 // pred_check_branch
          %210 = sbr.rel (%p208) target = $region40
        $region39: #{tpu_custom_call.1} parent=31 // pred_region
          %211 = dma.done [#allocation6], 512
        $region40: #{tpu_custom_call.1} parent=31 // pred_fallthru
          _
        %s212 = sand.u32 %s41, 1
        %s213 = scalar_lea.sflag [#allocation3], %s212
        %s214 = sand.u32 %s41, 1
        %s215 = smul.addr %s214, 8
        %s216 = scalar_lea.vmem [#allocation2], %s215
        %p217 = pneg %p54
        %p218 = pneg %p51
        %p219 = pneg %p80
        %p220 = pneg %p77
        %p221 = scmp.lt.s32.totalorder %s26, 0
        %s222 = scalar_select %p221, %s26, 0
        %s223 = scalar_lea.vmem %s2, %s222
        %p224 = pneg %p106
        %p225 = pneg %p103
        %p226 = pneg %p134
        %p227 = pneg %p131
        %s228 = sand.u32 %s121, 1
        %s229 = scalar_lea.sflag [#allocation4], %s228
        %s230 = sand.u32 %s121, 1
        %s231 = smul.addr %s230, 8
        %s232 = scalar_lea.vmem [#allocation7], %s231
        %p233 = scmp.lt.s32.totalorder %s26, 0
        %s234 = scalar_select %p233, %s26, 0
        %s235 = scalar_lea.vmem %s2, %s234
        %v236 = vld [vmem:[%s203] sm:$0xff]
        %v237 = vld [vmem:[#allocation5] sm:$0xff]
        %v238 = vld [vmem:[#allocation5 + $0x8] sm:$0xff]
        %v239 = vld [vmem:[#allocation5 + $0x10] sm:$0xff]
        %v240 = vld [vmem:[#allocation5 + $0x18] sm:$0xff]
        %v241 = vld [vmem:[%s235] sm:$0x1]
        %v243 = vlaneseq
        %v244 = vshrl.u32 %v243, 7
        %v245 = vsub.s32 0, %v244
        %v246 = vrot.slane %v241, %v245
        %vm248 = vcmask 261120
        %v250 = vsel %vm248, %v236, 0
        %252 = vmatprep.subr.mxu0 0.0
        %253 = vmatpush1.msra.mxu0 0.0
        %254 = vmatprep.subr.mxu0 0.0
        %255 = vmatpush1.msra.mxu0 0.0
        %256 = vmatprep.subr.mxu0 0.0
        %257 = vmatpush1.msra.mxu0 0.0
        %258 = vmatprep.subr.mxu0 0.0
        %259 = vmatpush1.msra.mxu0 0.0
        %260 = vmatprep.subr.mxu0 0.0
        %261 = vmatpush1.msra.mxu0 0.0
        %262 = vmatprep.subr.mxu0 0.0
        %263 = vmatpush1.msra.mxu0 0.0
        %264 = vmatprep.subr.mxu0 0.0
        %265 = vmatpush1.msra.mxu0 0.0
        %266 = vmatprep.subr.mxu0 0.0
        %267 = vmatpush1.msra.mxu0 0.0
        %268 = vmatprep.subr.mxu0 0.0
        %269 = vmatpush1.msra.mxu0 0.0
        %270 = vmatprep.subr.mxu0 0.0
        %271 = vmatpush1.msra.mxu0 0.0
        %272 = vmatprep.subr.mxu0 0.0
        %273 = vmatpush1.msra.mxu0 0.0
        %274 = vmatprep.subr.mxu0 0.0
        %275 = vmatpush1.msra.mxu0 0.0
        %276 = vmatprep.subr.mxu0 0.0
        %277 = vmatpush1.msra.mxu0 %v240
        %278 = vmatprep.subr.mxu0 0.0
        %279 = vmatpush1.msra.mxu0 %v239
        %280 = vmatprep.subr.mxu0 0.0
        %281 = vmatpush1.msra.mxu0 %v238
        %282 = vmatprep.subr.mxu0 0.0
        %283 = vmatpush1.msra.mxu0 %v237
        %284 = vmatprep.subr.mxu0 0.0
        %285 = vmatpush2.msra.mxu0 0.0
        %286 = vmatprep.subr.mxu0 0.0
        %287 = vmatpush2.msra.mxu0 0.0
        %288 = vmatprep.subr.mxu0 0.0
        %289 = vmatpush2.msra.mxu0 0.0
        %290 = vmatprep.subr.mxu0 0.0
        %291 = vmatpush2.msra.mxu0 0.0
        %292 = vmatprep.subr.mxu0 0.0
        %293 = vmatpush2.msra.mxu0 0.0
        %294 = vmatprep.subr.mxu0 0.0
        %295 = vmatpush2.msra.mxu0 0.0
        %296 = vmatprep.subr.mxu0 0.0
        %297 = vmatpush2.msra.mxu0 0.0
        %298 = vmatprep.subr.mxu0 0.0
        %299 = vmatpush2.msra.mxu0 0.0
        %300 = vmatprep.subr.mxu0 0.0
        %301 = vmatpush2.msra.mxu0 0.0
        %302 = vmatprep.subr.mxu0 0.0
        %303 = vmatpush2.msra.mxu0 0.0
        %304 = vmatprep.subr.mxu0 0.0
        %305 = vmatpush2.msra.mxu0 0.0
        %306 = vmatprep.subr.mxu0 0.0
        %307 = vmatpush2.msra.mxu0 0.0
        %308 = vmatprep.subr.mxu0 0.0
        %309 = vmatpush2.msra.mxu0 0.0
        %310 = vmatprep.subr.mxu0 0.0
        %311 = vmatpush2.msra.mxu0 0.0
        %312 = vmatprep.subr.mxu0 0.0
        %313 = vmatpush2.msra.mxu0 0.0
        %314 = vmatprep.subr.mxu0 0.0
        %315 = vmatpush2.msra.mxu0 0.0
        %316 = vmatprep.mubr.f32.mxu0 0.0
        %317 = vmatmul.mubr.f32.gmra.mxu0 %v250
        %v318 = vpop.f32.mrf.mxu0
        %v319 = vadd.f32 %v246, %v318
        %v320 = vpop.f32.mrf.mxu0
        %321 = vdwg.mxu0
        %vm322 = vcmask 523264
        %323 = vst.msk [vmem:[%s232] sm:$0xff] %vm322, %v319
        %s324 = sand.u32 %s121, 1
        %s325 = scalar_lea.sflag [#allocation4], %s324
        %s326 = sand.u32 %s121, 1
        %s327 = smul.addr %s326, 8
        %s328 = scalar_lea.vmem [#allocation7], %s327
        // Predicated region
        $region41: #{tpu_custom_call.1} parent=31 // pred_check
          %p329 = pneg %p131
        $region42: #{tpu_custom_call.1} parent=31 // pred_check_branch
          %331 = sbr.rel (%p329) target = $region44
        $region43: #{tpu_custom_call.1} parent=31 // pred_region
          %s333 = ssub.s32 128, 128
          %334 = vsyncadd %s325, %s333
          %s335 = sadd.s32 %s26, %s25
          %s336 = smul.addr %s335, 128
          %s337 = scalar_lea.hbm %s3, %s336
          %s339 = sshll.u32 %s328, 4
          %s340 = int_to_ptr.vmem [resolvable:$true] %s339
          %342 = dma.vmem_to_hbm [thread:$0]  %s340, 128, %s337, %s325
        $region44: #{tpu_custom_call.1} parent=31 // pred_fallthru
          _
      $region32: #{tpu_custom_call.1} parent=5 // pred_fallthru
        _
      %p343 = scmp.le.s32.totalorder 2, %s16
      // Predicated region
      $region45: #{tpu_custom_call.1} parent=5 // pred_check
        %p344 = pneg %p343
      $region46: #{tpu_custom_call.1} parent=5 // pred_check_branch
        %346 = sbr.rel (%p344) target = $region48
      $region47: #{tpu_custom_call.1} parent=5 // pred_region
        %s347 = ssub.s32 %s16, 2
        // Predicated region
        $region49: #{tpu_custom_call.1} parent=47 // pred_check
          %p348 = pneg %p137
        $region50: #{tpu_custom_call.1} parent=47 // pred_check_branch
          %350 = sbr.rel (%p348) target = $region52
        $region51: #{tpu_custom_call.1} parent=47 // pred_region
          %s351 = sand.u32 %s122, 1
          %s352 = scalar_lea.sflag [#allocation4], %s351
          %s353 = sand.u32 %s122, 1
          %s354 = smul.addr %s353, 8
          %s355 = scalar_lea.vmem [#allocation7], %s354
          %356 = dma.done %s352, 128
        $region52: #{tpu_custom_call.1} parent=47 // pred_fallthru
          _
      $region48: #{tpu_custom_call.1} parent=5 // pred_fallthru
        _
    $region6: #{tpu_custom_call.1} parent=1 // loop_footer
      %s20 = sadd.s32 1, %s16
    $region7: #{tpu_custom_call.1} parent=1 // loop_footer_branch
      %15 = sbr.rel target = $region3
    $region8: #{tpu_custom_call.1} parent=1 // loop_exit
      _
    %357 = vsyncpa [#allocation3], 1
    %s358 = scalar_lea.sflag [#allocation3], 1
    %359 = vsyncpa %s358, 1
    %360 = vsyncpa [#allocation6], 1
    %361 = vsyncpa [#allocation4], 1
    %s362 = scalar_lea.sflag [#allocation4], 1
    %363 = vsyncpa %s362, 1

</llo_original>
